<compile_context>
chip_gen: v6e
topology: v6e:2x2x1
jax: 0.10.0
libtpu: 0.0.40
codegen_flags: <defaults>
</compile_context>

<pallas_src>
import jax
import jax.numpy as jnp
import numpy as np
from jax.experimental import pallas as pl
from jax.experimental.pallas import tpu as pltpu


def _round_up(x, m):
    return (x + m - 1) // m * m


def graph_conv_kernel(adj_ref, feat_ref, src_norm_ref, dst_norm_ref, out_ref, acc_ref):
    """One (dst-tile i, src-tile k) grid step.

    adj_ref      : (tm, tk)  adjacency tile (0/1, bf16)
    feat_ref     : (tk, Fp)  source-feature tile (f32)
    src_norm_ref : (tk, 1)   per-source normalization
    dst_norm_ref : (tm, 1)   per-destination normalization
    out_ref      : (tm, Fp)  output tile (resident across the k reduction axis)
    acc_ref      : (tm, Fp)  f32 VMEM accumulator scratch
    """
    k = pl.program_id(1)

    @pl.when(k == 0)
    def _init():
        acc_ref[...] = jnp.zeros_like(acc_ref)

    # Scale the features (not the adjacency): O(tk*Fp) VPU work instead of O(tm*tk),
    # and it keeps adj as a pure 0/1 matmul operand.
    feat_scaled = feat_ref[...] * src_norm_ref[...]
    adj = adj_ref[...].astype(jnp.float32)  # bf16 0/1 -> exact f32

    acc_ref[...] += jnp.dot(adj, feat_scaled, preferred_element_type=jnp.float32)

    @pl.when(k == pl.num_programs(1) - 1)
    def _finalize():
        out_ref[...] = (acc_ref[...] * dst_norm_ref[...]).astype(out_ref.dtype)


def graph_conv(adj, feat, *, norm="both", allow_zero_in_degree=False,
               tm=256, tk=512, adj_dtype=jnp.bfloat16):
    """Pallas GraphConv forward. adj: (N, N) with adj[dst, src] in {0, 1}; feat: (N, F)."""
    if norm not in ("none", "both", "right", "left"):
        raise KeyError(f'Invalid norm value "{norm}".')
    N, F = feat.shape
    assert adj.shape == (N, N)

    # ---- degrees / norm factors precomputed with plain XLA (one O(N^2) read) ----
    adj_f32 = adj.astype(jnp.float32)
    in_deg = jnp.sum(adj_f32, axis=1)    # (N,) incoming edges per dst node
    out_deg = jnp.sum(adj_f32, axis=0)   # (N,) outgoing edges per src node

    if not allow_zero_in_degree:
        # Mirrors the PyTorch module's in_degrees()==0 guard, folded onto the already
        # computed in_deg. NOTE: device->host sync; pass allow_zero_in_degree=True on
        # the hot path to keep the call fully asynchronous.
        if bool(jax.device_get(jnp.any(in_deg == 0))):
            raise KeyError(
                "There are 0-in-degree nodes in the graph, output for those nodes "
                "will be invalid. Add self-loops or set allow_zero_in_degree=True.")

    if norm == "both":
        src_norm = jnp.maximum(out_deg, 1.0) ** -0.5
        dst_norm = jnp.maximum(in_deg, 1.0) ** -0.5
    elif norm == "left":
        src_norm = 1.0 / jnp.maximum(out_deg, 1.0)
        dst_norm = jnp.ones_like(in_deg)
    elif norm == "right":
        src_norm = jnp.ones_like(out_deg)
        dst_norm = 1.0 / jnp.maximum(in_deg, 1.0)
    else:  # 'none'
        src_norm = jnp.ones_like(out_deg)
        dst_norm = jnp.ones_like(in_deg)

    # ---- tile sizes & padding (lane-dense F, (8,128)-aligned tiles) ----
    tm = min(tm, _round_up(N, 8))      # dst tile (sublane axis of adj/out)
    tk = min(tk, _round_up(N, 128))    # src tile (lane axis of adj)
    Np_r = _round_up(N, tm)            # padded dst extent
    Np_c = _round_up(N, tk)            # padded src extent
    Fp = _round_up(F, 128)             # lane-dense feature extent

    adj_p = jnp.pad(adj.astype(adj_dtype), ((0, Np_r - N), (0, Np_c - N)))
    feat_p = jnp.pad(feat.astype(jnp.float32), ((0, Np_c - N), (0, Fp - F)))
    src_norm_p = jnp.pad(src_norm.astype(jnp.float32)[:, None], ((0, Np_c - N), (0, 0)))
    dst_norm_p = jnp.pad(dst_norm.astype(jnp.float32)[:, None], ((0, Np_r - N), (0, 0)))

    grid = (Np_r // tm, Np_c // tk)   # (dst tiles: parallel, src tiles: reduction, last)

    out_p = pl.pallas_call(
        graph_conv_kernel,
        out_shape=jax.ShapeDtypeStruct((Np_r, Fp), feat.dtype),
        grid=grid,
        in_specs=[
            pl.BlockSpec((tm, tk), lambda i, k: (i, k)),   # adjacency tile (streamed, bf16)
            pl.BlockSpec((tk, Fp), lambda i, k: (k, 0)),   # source feature tile
            pl.BlockSpec((tk, 1), lambda i, k: (k, 0)),    # per-src norm column
            pl.BlockSpec((tm, 1), lambda i, k: (i, 0)),    # per-dst norm column
        ],
        out_specs=pl.BlockSpec((tm, Fp), lambda i, k: (i, 0)),
        scratch_shapes=[pltpu.VMEM((tm, Fp), jnp.float32)],
        compiler_params=pltpu.CompilerParams(
            dimension_semantics=("parallel", "arbitrary"),
        ),
    )(adj_p, feat_p, src_norm_p, dst_norm_p)

    return out_p[:N, :F]


def graph_conv_ref(adj, feat, norm="both"):
    """Plain-JAX reference mirroring the PyTorch forward."""
    fs = feat
    if norm in ("left", "both"):
        out_deg = jnp.maximum(jnp.sum(adj, axis=0), 1.0)
        n = out_deg ** -0.5 if norm == "both" else 1.0 / out_deg
        fs = fs * n[:, None]
    rst = adj @ fs
    if norm in ("right", "both"):
        in_deg = jnp.maximum(jnp.sum(adj, axis=1), 1.0)
        n = in_deg ** -0.5 if norm == "both" else 1.0 / in_deg
        rst = rst * n[:, None]
    return rst


if __name__ == "__main__":
    key = jax.random.PRNGKey(0)
    k_adj, k_feat, k_adj2, k_feat2 = jax.random.split(key, 4)

    # ---- main test: tile-aligned shapes, multi-step reduction (grid = (2, 2)) ----
    N, F = 256, 32
    adj = jax.random.bernoulli(k_adj, p=0.05, shape=(N, N)).astype(jnp.float32)
    adj = jnp.maximum(adj, jnp.eye(N, dtype=jnp.float32))   # self-loops: no 0-in-degree
    feat = jax.random.normal(k_feat, (N, F), dtype=jnp.float32)

    # Exercise the zero-in-degree check once (graph has self-loops, so it passes).
    out = graph_conv(adj, feat, norm="both", tm=128, tk=128)
    out = jax.block_until_ready(out)
    ref = graph_conv_ref(adj, feat, norm="both")
    np.testing.assert_allclose(np.asarray(out), np.asarray(ref), rtol=1e-4, atol=1e-4)

    for nm in ("none", "left", "right"):
        o = jax.block_until_ready(
            graph_conv(adj, feat, norm=nm, allow_zero_in_degree=True, tm=128, tk=128))
        r = graph_conv_ref(adj, feat, norm=nm)
        np.testing.assert_allclose(np.asarray(o), np.asarray(r), rtol=1e-4, atol=1e-4)

    # ---- ragged test: exercises padding of N and F and the no-host-sync path ----
    N2, F2 = 200, 20
    adj2 = jax.random.bernoulli(k_adj2, p=0.1, shape=(N2, N2)).astype(jnp.float32)
    adj2 = jnp.maximum(adj2, jnp.eye(N2, dtype=jnp.float32))
    feat2 = jax.random.normal(k_feat2, (N2, F2), dtype=jnp.float32)

    out2 = jax.block_until_ready(
        graph_conv(adj2, feat2, norm="both", allow_zero_in_degree=True))
    ref2 = graph_conv_ref(adj2, feat2, norm="both")
    np.testing.assert_allclose(np.asarray(out2), np.asarray(ref2), rtol=1e-4, atol=1e-4)

    print("KERNEL_OK")
</pallas_src>

<mosaic_0001>
module attributes {stable_mosaic.version = 11 : i64} {
  func.func @graph_conv_kernel(%arg0: i32, %arg1: i32, %arg2: memref<128x128xbf16, #tpu.memory_space<vmem>>, %arg3: memref<128x128xf32, #tpu.memory_space<vmem>>, %arg4: memref<128x1xf32, #tpu.memory_space<vmem>>, %arg5: memref<128x1xf32, #tpu.memory_space<vmem>>, %arg6: memref<128x128xf32, #tpu.memory_space<vmem>>, %arg7: memref<128x128xf32, #tpu.memory_space<vmem>>) attributes {dimension_semantics = [#tpu.dimension_semantics<parallel>, #tpu.dimension_semantics<arbitrary>], iteration_bounds = array<i64: 2, 2>, scalar_prefetch = 0 : i64, scratch_operands = 1 : i64, tpu.core_type = #tpu.core_type<tc>, window_params = [{transform_indices = @transform_0, window_bounds = array<i64: 128, 128>}, {transform_indices = @transform_1, window_bounds = array<i64: 128, 128>}, {transform_indices = @transform_2, window_bounds = array<i64: 128, 1>}, {transform_indices = @transform_3, window_bounds = array<i64: 128, 1>}, {transform_indices = @transform_4, window_bounds = array<i64: 128, 128>}]} {
    %c0_i32 = arith.constant 0 : i32
    %0 = arith.cmpi eq, %arg1, %c0_i32 : i32
    %1 = arith.extui %0 : i1 to i32
    %c0_i32_0 = arith.constant 0 : i32
    %2 = arith.cmpi ne, %1, %c0_i32_0 : i32
    scf.if %2 {
      %cst_11 = arith.constant 0.000000e+00 : f32
      %16 = vector.broadcast %cst_11 : f32 to vector<128x128xf32>
      %c0_12 = arith.constant 0 : index
      %c0_13 = arith.constant 0 : index
      %17 = vector.load %arg7[%c0_12, %c0_13] : memref<128x128xf32, #tpu.memory_space<vmem>>, vector<128x128xf32>
      tpu.vector_store %arg7[%c0_12, %c0_13], %16 {strides = array<i32>} : memref<128x128xf32, #tpu.memory_space<vmem>>, vector<128x128xf32>,
    } else {
    }
    %c0 = arith.constant 0 : index
    %c0_1 = arith.constant 0 : index
    %3 = vector.load %arg3[%c0, %c0_1] : memref<128x128xf32, #tpu.memory_space<vmem>>, vector<128x128xf32>
    %c0_2 = arith.constant 0 : index
    %c0_3 = arith.constant 0 : index
    %4 = vector.load %arg4[%c0_2, %c0_3] : memref<128x1xf32, #tpu.memory_space<vmem>>, vector<128x1xf32>
    %5 = vector.broadcast %4 : vector<128x1xf32> to vector<128x128xf32>
    %6 = arith.mulf %3, %5 : vector<128x128xf32>
    %c0_4 = arith.constant 0 : index
    %c0_5 = arith.constant 0 : index
    %7 = vector.load %arg2[%c0_4, %c0_5] : memref<128x128xbf16, #tpu.memory_space<vmem>>, vector<128x128xbf16>
    %8 = arith.extf %7 : vector<128x128xbf16> to vector<128x128xf32>
    %c0_6 = arith.constant 0 : index
    %c0_7 = arith.constant 0 : index
    %9 = vector.load %arg7[%c0_6, %c0_7] : memref<128x128xf32, #tpu.memory_space<vmem>>, vector<128x128xf32>
    %cst = arith.constant dense<0.000000e+00> : vector<128x128xf32>
    %10 = tpu.matmul %8, %6, %cst {dimension_numbers = #tpu.dot_dimension_numbers<[1], [0], [0], [1], [0, 0, 1, 1], [], []>} : vector<128x128xf32>, vector<128x128xf32>, vector<128x128xf32> -> vector<128x128xf32>
    %11 = arith.addf %9, %10 : vector<128x128xf32>
    %c0_8 = arith.constant 0 : index
    %c0_9 = arith.constant 0 : index
    %12 = vector.load %arg7[%c0_8, %c0_9] : memref<128x128xf32, #tpu.memory_space<vmem>>, vector<128x128xf32>
    tpu.vector_store %arg7[%c0_8, %c0_9], %11 {strides = array<i32>} : memref<128x128xf32, #tpu.memory_space<vmem>>, vector<128x128xf32>,
    %c1_i32 = arith.constant 1 : i32
    %13 = arith.cmpi eq, %arg1, %c1_i32 : i32
    %14 = arith.extui %13 : i1 to i32
    %c0_i32_10 = arith.constant 0 : i32
    %15 = arith.cmpi ne, %14, %c0_i32_10 : i32
    scf.if %15 {
      %c0_11 = arith.constant 0 : index
      %c0_12 = arith.constant 0 : index
      %16 = vector.load %arg7[%c0_11, %c0_12] : memref<128x128xf32, #tpu.memory_space<vmem>>, vector<128x128xf32>
      %c0_13 = arith.constant 0 : index
      %c0_14 = arith.constant 0 : index
      %17 = vector.load %arg5[%c0_13, %c0_14] : memref<128x1xf32, #tpu.memory_space<vmem>>, vector<128x1xf32>
      %18 = vector.broadcast %17 : vector<128x1xf32> to vector<128x128xf32>
      %19 = arith.mulf %16, %18 : vector<128x128xf32>
      %c0_15 = arith.constant 0 : index
      %c0_16 = arith.constant 0 : index
      %20 = vector.load %arg6[%c0_15, %c0_16] : memref<128x128xf32, #tpu.memory_space<vmem>>, vector<128x128xf32>
      tpu.vector_store %arg6[%c0_15, %c0_16], %19 {strides = array<i32>} : memref<128x128xf32, #tpu.memory_space<vmem>>, vector<128x128xf32>,
    } else {
    }
    return
  }
  func.func @transform_0(%arg0: i32, %arg1: i32) -> (i32, i32) {
    %c0_i32 = arith.constant 0 : i32
    return %arg0, %arg1 : i32, i32
  }
  func.func @transform_1(%arg0: i32, %arg1: i32) -> (i32, i32) {
    %c0_i32 = arith.constant 0 : i32
    %c0_i32_0 = arith.constant 0 : i32
    return %arg1, %c0_i32 : i32, i32
  }
  func.func @transform_2(%arg0: i32, %arg1: i32) -> (i32, i32) {
    %c0_i32 = arith.constant 0 : i32
    %c0_i32_0 = arith.constant 0 : i32
    return %arg1, %c0_i32 : i32, i32
  }
  func.func @transform_3(%arg0: i32, %arg1: i32) -> (i32, i32) {
    %c0_i32 = arith.constant 0 : i32
    %c0_i32_0 = arith.constant 0 : i32
    return %arg0, %c0_i32 : i32, i32
  }
  func.func @transform_4(%arg0: i32, %arg1: i32) -> (i32, i32) {
    %c0_i32 = arith.constant 0 : i32
    %c0_i32_0 = arith.constant 0 : i32
    return %arg0, %c0_i32 : i32, i32
  }
}

</mosaic_0001>

<llo_original>
// kernel: tpu_custom_call.1
$region0: #{tpu_custom_call.1}
  #allocation0 [shape = 'u32[]', space=smem, size = 0x4, offset = 0x4, fixed_abs, tag = 'smem constant byte address 0x4 - core index']
  #allocation1 [shape = 'u32[144,128]{1,0:T(1,128)}', space=vmem, size = 0x12000, scoped, tag = 'internal scratch']
  #allocation2 [shape = 'f32[128,128]{1,0:T(8,128)}', space=vmem, size = 0x10000, scoped, tag = 'scratch operand']
  %s0 = inlined_call_operand.vmem [shape: bf16[256,256], index: 0, kind: input, shape index: {}]
  %s1 = inlined_call_operand.vmem [shape: f32[256,128], index: 1, kind: input, shape index: {}]
  %s2 = inlined_call_operand.vmem [shape: f32[256,1], index: 2, kind: input, shape index: {}]
  %s3 = inlined_call_operand.vmem [shape: f32[256,1], index: 3, kind: input, shape index: {}]
  %s4 = inlined_call_operand.hbm [shape: f32[256,128], index: 4, kind: output, shape index: {}]
  %s5 = sld [smem:[#allocation0]]
  $region98: #{tpu_custom_call.1} parent=0
    _
  %s7 = ssub.s32 1, %s5
  %s8 = scalar_select 0, %s7, %s5
  $region1: #{tpu_custom_call.1} parent=0
    #allocation3 [shape = 'u8[65536]{0}', space=vmem, size = 0x10000, scoped, tag = 'input window, operand 0']
    #allocation4 [shape = 'u8[131072]{0}', space=vmem, size = 0x20000, scoped, tag = 'output window, operand 0']
    #allocation5 [shape = 's32[2]{0}', space=sflag, size = 0x8, scoped, tag = 'scoped memory for tpu_custom_call.1']
    %9 = vsyncpa [#allocation5], 0
    %s10 = scalar_lea.sflag [#allocation5], 1
    %11 = vsyncpa %s10, 0
    loop: start=0, step=1, limit=6
    $region2: #{tpu_custom_call.1} parent=1 // loop_pre_header
      _
    $region3: #{tpu_custom_call.1} parent=1 // loop_header
      %s13 = sphi 0, %s17
      %p14 = scmp.ge.s32.totalorder %s13, 6
      %s20 = sphi 0, %s32
      %s21 = sphi 0, %s28
      %s22 = sphi 0, %s20
      %s23 = sphi 0, %s21
      %s24 = sphi 0, %s22
      %s25 = sphi 0, %s23
      %s37 = sphi 0, %s39
      %s40 = sphi 0, %s37
      %s41 = sphi 0, %s40
      %s57 = sphi 0, %s41
      %s63 = sphi 0, %s65
      %s66 = sphi 0, %s63
      %s67 = sphi 0, %s66
      %s83 = sphi 0, %s67
      %s89 = sphi 0, %s91
      %s92 = sphi 0, %s89
      %s93 = sphi 0, %s92
      %s109 = sphi 0, %s93
      %s115 = sphi 0, %s117
      %s118 = sphi 0, %s115
      %s119 = sphi 0, %s118
      %s135 = sphi 0, %s119
      %s141 = sphi 0, %s143
      %s144 = sphi 0, %s141
      %s145 = sphi 0, %s144
      %s161 = sphi 0, %s145
    $region4: #{tpu_custom_call.1} parent=1 // loop_header_branch
      %16 = sbr.rel (%p14) target = $region8
    $region5: #{tpu_custom_call.1} parent=1 // loop_body
      %s18 = ssub.s32 %s13, 1
      %s19 = ssub.s32 %s13, 2
      %s26 = sadd.s32 1, %s21
      %p27 = scmp.ge.s32.totalorder %s26, 2
      %s28 = scalar_select %p27, 0, %s26
      %s29 = sadd.s32 1, %s20
      %s30 = scalar_select %p27, %s29, %s20
      %p31 = scmp.ge.s32.totalorder %s30, 2
      %s32 = scalar_select %p31, 0, %s30
      %s33 = ssub.s32 %s20, %s32
      %s34 = ssub.s32 %s21, %s28
      %s35 = sor.u32 %s33, %s34
      %p36 = scmp.eq.s32.totalorder %s35, 0
      %s38 = sadd.s32 %s37, 1
      %s39 = scalar_select %p36, %s37, %s38
      %p42 = pneg %p36
      %p43 = scmp.eq.s32.totalorder %s13, 3
      %p44 = por %p42, %p43
      %p45 = scmp.ne.s32.totalorder %s37, %s40
      %p46 = scmp.eq.s32.totalorder %s13, 0
      %p47 = por %p45, %p46
      %p48 = scmp.ne.s32.totalorder %s37, %s40
      %p49 = scmp.eq.s32.totalorder %s18, 3
      %p50 = por %p48, %p49
      %p51 = scmp.ne.s32.totalorder %s40, %s41
      %p52 = scmp.eq.s32.totalorder %s18, 0
      %p53 = por %p51, %p52
      %p54 = scmp.ne.s32.totalorder %s40, %s41
      %p55 = scmp.eq.s32.totalorder %s19, 3
      %p56 = por %p54, %p55
      %p58 = scmp.ne.s32.totalorder %s41, %s57
      %p59 = scmp.eq.s32.totalorder %s19, 0
      %p60 = por %p58, %p59
      %s61 = ssub.s32 %s21, %s28
      %p62 = scmp.eq.s32.totalorder %s61, 0
      %s64 = sadd.s32 %s63, 1
      %s65 = scalar_select %p62, %s63, %s64
      %p68 = pneg %p62
      %p69 = scmp.eq.s32.totalorder %s13, 3
      %p70 = por %p68, %p69
      %p71 = scmp.ne.s32.totalorder %s63, %s66
      %p72 = scmp.eq.s32.totalorder %s13, 0
      %p73 = por %p71, %p72
      %p74 = scmp.ne.s32.totalorder %s63, %s66
      %p75 = scmp.eq.s32.totalorder %s18, 3
      %p76 = por %p74, %p75
      %p77 = scmp.ne.s32.totalorder %s66, %s67
      %p78 = scmp.eq.s32.totalorder %s18, 0
      %p79 = por %p77, %p78
      %p80 = scmp.ne.s32.totalorder %s66, %s67
      %p81 = scmp.eq.s32.totalorder %s19, 3
      %p82 = por %p80, %p81
      %p84 = scmp.ne.s32.totalorder %s67, %s83
      %p85 = scmp.eq.s32.totalorder %s19, 0
      %p86 = por %p84, %p85
      %s87 = ssub.s32 %s21, %s28
      %p88 = scmp.eq.s32.totalorder %s87, 0
      %s90 = sadd.s32 %s89, 1
      %s91 = scalar_select %p88, %s89, %s90
      %p94 = pneg %p88
      %p95 = scmp.eq.s32.totalorder %s13, 3
      %p96 = por %p94, %p95
      %p97 = scmp.ne.s32.totalorder %s89, %s92
      %p98 = scmp.eq.s32.totalorder %s13, 0
      %p99 = por %p97, %p98
      %p100 = scmp.ne.s32.totalorder %s89, %s92
      %p101 = scmp.eq.s32.totalorder %s18, 3
      %p102 = por %p100, %p101
      %p103 = scmp.ne.s32.totalorder %s92, %s93
      %p104 = scmp.eq.s32.totalorder %s18, 0
      %p105 = por %p103, %p104
      %p106 = scmp.ne.s32.totalorder %s92, %s93
      %p107 = scmp.eq.s32.totalorder %s19, 3
      %p108 = por %p106, %p107
      %p110 = scmp.ne.s32.totalorder %s93, %s109
      %p111 = scmp.eq.s32.totalorder %s19, 0
      %p112 = por %p110, %p111
      %s113 = ssub.s32 %s20, %s32
      %p114 = scmp.eq.s32.totalorder %s113, 0
      %s116 = sadd.s32 %s115, 1
      %s117 = scalar_select %p114, %s115, %s116
      %p120 = pneg %p114
      %p121 = scmp.eq.s32.totalorder %s13, 3
      %p122 = por %p120, %p121
      %p123 = scmp.ne.s32.totalorder %s115, %s118
      %p124 = scmp.eq.s32.totalorder %s13, 0
      %p125 = por %p123, %p124
      %p126 = scmp.ne.s32.totalorder %s115, %s118
      %p127 = scmp.eq.s32.totalorder %s18, 3
      %p128 = por %p126, %p127
      %p129 = scmp.ne.s32.totalorder %s118, %s119
      %p130 = scmp.eq.s32.totalorder %s18, 0
      %p131 = por %p129, %p130
      %p132 = scmp.ne.s32.totalorder %s118, %s119
      %p133 = scmp.eq.s32.totalorder %s19, 3
      %p134 = por %p132, %p133
      %p136 = scmp.ne.s32.totalorder %s119, %s135
      %p137 = scmp.eq.s32.totalorder %s19, 0
      %p138 = por %p136, %p137
      %s139 = ssub.s32 %s20, %s32
      %p140 = scmp.eq.s32.totalorder %s139, 0
      %s142 = sadd.s32 %s141, 1
      %s143 = scalar_select %p140, %s141, %s142
      %p146 = pneg %p140
      %p147 = scmp.eq.s32.totalorder %s13, 3
      %p148 = por %p146, %p147
      %p149 = scmp.ne.s32.totalorder %s141, %s144
      %p150 = scmp.eq.s32.totalorder %s13, 0
      %p151 = por %p149, %p150
      %p152 = scmp.ne.s32.totalorder %s141, %s144
      %p153 = scmp.eq.s32.totalorder %s18, 3
      %p154 = por %p152, %p153
      %p155 = scmp.ne.s32.totalorder %s144, %s145
      %p156 = scmp.eq.s32.totalorder %s18, 0
      %p157 = por %p155, %p156
      %p158 = scmp.ne.s32.totalorder %s144, %s145
      %p159 = scmp.eq.s32.totalorder %s19, 3
      %p160 = por %p158, %p159
      %p162 = scmp.ne.s32.totalorder %s145, %s161
      %p163 = scmp.eq.s32.totalorder %s19, 0
      %p164 = por %p162, %p163
      %p165 = scmp.le.s32.totalorder 1, %s13
      %p166 = scmp.lt.s32.totalorder %s13, 5
      %p167 = pnand %p165, %p166
      %p168 = pneg %p167
      // Predicated region
      $region9: #{tpu_custom_call.1} parent=5 // pred_check
        _
      $region10: #{tpu_custom_call.1} parent=5 // pred_check_branch
        %170 = sbr.rel (%p167) target = $region12
      $region11: #{tpu_custom_call.1} parent=5 // pred_region
        %s171 = ssub.s32 %s13, 1
      $region12: #{tpu_custom_call.1} parent=5 // pred_fallthru
        _
      %p172 = scmp.lt.s32.totalorder %s13, 4
      // Predicated region
      $region13: #{tpu_custom_call.1} parent=5 // pred_check
        %p173 = pneg %p172
      $region14: #{tpu_custom_call.1} parent=5 // pred_check_branch
        %175 = sbr.rel (%p173) target = $region16
      $region15: #{tpu_custom_call.1} parent=5 // pred_region
        // Predicated region
        $region17: #{tpu_custom_call.1} parent=15 // pred_check
          %p176 = pneg %p47
        $region18: #{tpu_custom_call.1} parent=15 // pred_check_branch
          %178 = sbr.rel (%p176) target = $region20
        $region19: #{tpu_custom_call.1} parent=15 // pred_region
          %s179 = sand.u32 %s37, 1
          %s180 = sand.u32 %s37, 1
          %s181 = smul.addr %s180, 64
          %s182 = scalar_lea.vmem [#allocation3], %s181
          %s183 = smul.u32 16, %s20
          %s184 = smul.addr %s183, 2
          %s185 = sadd.s32 %s21, %s184
          %s186 = smul.addr %s185, 4
          %s187 = scalar_lea.vmem %s0, %s186
          // Predicated region
          $region21: #{tpu_custom_call.1} parent=19 // pred_check
            _
          $region22: #{tpu_custom_call.1} parent=19 // pred_check_branch
            %189 = sbr.rel (0) target = $region24
          $region23: #{tpu_custom_call.1} parent=19 // pred_region
            // Predicated region
            $region25: #{tpu_custom_call.1} parent=23 // pred_check
              _
            $region26: #{tpu_custom_call.1} parent=23 // pred_check_branch
              %191 = sbr.rel target = $region28
            $region27: #{tpu_custom_call.1} parent=23 // pred_region
              // Predicated region
              $region40: #{tpu_custom_call.1} parent=27 // pred_check
                _
              $region41: #{tpu_custom_call.1} parent=27 // pred_check_branch
                %237 = sbr.rel (0) target = $region43
              $region42: #{tpu_custom_call.1} parent=27 // pred_region
                loop: start=0, step=1, limit=1
                $region44: #{tpu_custom_call.1} parent=42 // loop_pre_header
                  _
                $region45: #{tpu_custom_call.1} parent=42 // loop_header
                  %s239 = sphi 0, %s243
                  %p240 = scmp.ge.s32.totalorder %s239, 1
                  %s244 = sphi %s187, %s187
                  %s245 = sphi %s182, %s182
                $region46: #{tpu_custom_call.1} parent=42 // loop_header_branch
                  %242 = sbr.rel (%p240) target = $region50
                $region47: #{tpu_custom_call.1} parent=42 // loop_body
                  _
                $region48: #{tpu_custom_call.1} parent=42 // loop_footer
                  %s243 = sadd.s32 1, %s239
                $region49: #{tpu_custom_call.1} parent=42 // loop_footer_branch
                  %238 = sbr.rel target = $region45
                $region50: #{tpu_custom_call.1} parent=42 // loop_exit
                  _
                %s247 = ssub.s32 16, 1
                loop: start=0, step=1, limit=1
                $region51: #{tpu_custom_call.1} parent=42 // loop_pre_header
                  _
                $region52: #{tpu_custom_call.1} parent=42 // loop_header
                  %s249 = sphi 0, %s253
                  %p250 = scmp.ge.s32.totalorder %s249, 1
                  %s254 = sphi %s187, %s187
                  %s255 = sphi %s182, %s182
                $region53: #{tpu_custom_call.1} parent=42 // loop_header_branch
                  %252 = sbr.rel (%p250) target = $region57
                $region54: #{tpu_custom_call.1} parent=42 // loop_body
                  %v256 = vld [vmem:[%s254] sm:%s247]
                  %257 = vst [vmem:[%s255] sm:%s247] %v256
                  %v258 = vld [vmem:[%s254 + $0x8] sm:%s247]
                  %259 = vst [vmem:[%s255 + $0x4] sm:%s247] %v258
                  %v260 = vld [vmem:[%s254 + $0x10] sm:%s247]
                  %261 = vst [vmem:[%s255 + $0x8] sm:%s247] %v260
                  %v262 = vld [vmem:[%s254 + $0x18] sm:%s247]
                  %263 = vst [vmem:[%s255 + $0xc] sm:%s247] %v262
                  %v264 = vld [vmem:[%s254 + $0x20] sm:%s247]
                  %265 = vst [vmem:[%s255 + $0x10] sm:%s247] %v264
                  %v266 = vld [vmem:[%s254 + $0x28] sm:%s247]
                  %267 = vst [vmem:[%s255 + $0x14] sm:%s247] %v266
                  %v268 = vld [vmem:[%s254 + $0x30] sm:%s247]
                  %269 = vst [vmem:[%s255 + $0x18] sm:%s247] %v268
                  %v270 = vld [vmem:[%s254 + $0x38] sm:%s247]
                  %271 = vst [vmem:[%s255 + $0x1c] sm:%s247] %v270
                  %v272 = vld [vmem:[%s254 + $0x40] sm:%s247]
                  %273 = vst [vmem:[%s255 + $0x20] sm:%s247] %v272
                  %v274 = vld [vmem:[%s254 + $0x48] sm:%s247]
                  %275 = vst [vmem:[%s255 + $0x24] sm:%s247] %v274
                  %v276 = vld [vmem:[%s254 + $0x50] sm:%s247]
                  %277 = vst [vmem:[%s255 + $0x28] sm:%s247] %v276
                  %v278 = vld [vmem:[%s254 + $0x58] sm:%s247]
                  %279 = vst [vmem:[%s255 + $0x2c] sm:%s247] %v278
                  %v280 = vld [vmem:[%s254 + $0x60] sm:%s247]
                  %281 = vst [vmem:[%s255 + $0x30] sm:%s247] %v280
                  %v282 = vld [vmem:[%s254 + $0x68] sm:%s247]
                  %283 = vst [vmem:[%s255 + $0x34] sm:%s247] %v282
                  %v284 = vld [vmem:[%s254 + $0x70] sm:%s247]
                  %285 = vst [vmem:[%s255 + $0x38] sm:%s247] %v284
                  %v286 = vld [vmem:[%s254 + $0x78] sm:%s247]
                  %287 = vst [vmem:[%s255 + $0x3c] sm:%s247] %v286
                $region55: #{tpu_custom_call.1} parent=42 // loop_footer
                  %s253 = sadd.s32 1, %s249
                $region56: #{tpu_custom_call.1} parent=42 // loop_footer_branch
                  %248 = sbr.rel target = $region52
                $region57: #{tpu_custom_call.1} parent=42 // loop_exit
                  _
              $region43: #{tpu_custom_call.1} parent=27 // pred_fallthru
                _
            $region28: #{tpu_custom_call.1} parent=23 // pred_fallthru
              _
            // Predicated region
            $region29: #{tpu_custom_call.1} parent=23 // pred_check
              _
            $region30: #{tpu_custom_call.1} parent=23 // pred_check_branch
              %193 = sbr.rel (0) target = $region32
            $region31: #{tpu_custom_call.1} parent=23 // pred_region
              %s195 = ssub.s32 16, 1
              loop: start=0, step=1, limit=1
              $region33: #{tpu_custom_call.1} parent=31 // loop_pre_header
                _
              $region34: #{tpu_custom_call.1} parent=31 // loop_header
                %s197 = sphi 0, %s201
                %p198 = scmp.ge.s32.totalorder %s197, 1
                %s202 = sphi %s187, %s187
                %s203 = sphi %s182, %s182
              $region35: #{tpu_custom_call.1} parent=31 // loop_header_branch
                %200 = sbr.rel (%p198) target = $region39
              $region36: #{tpu_custom_call.1} parent=31 // loop_body
                %v204 = vld [vmem:[%s202] sm:%s195]
                %205 = vst [vmem:[%s203] sm:%s195] %v204
                %v206 = vld [vmem:[%s202 + $0x8] sm:%s195]
                %207 = vst [vmem:[%s203 + $0x4] sm:%s195] %v206
                %v208 = vld [vmem:[%s202 + $0x10] sm:%s195]
                %209 = vst [vmem:[%s203 + $0x8] sm:%s195] %v208
                %v210 = vld [vmem:[%s202 + $0x18] sm:%s195]
                %211 = vst [vmem:[%s203 + $0xc] sm:%s195] %v210
                %v212 = vld [vmem:[%s202 + $0x20] sm:%s195]
                %213 = vst [vmem:[%s203 + $0x10] sm:%s195] %v212
                %v214 = vld [vmem:[%s202 + $0x28] sm:%s195]
                %215 = vst [vmem:[%s203 + $0x14] sm:%s195] %v214
                %v216 = vld [vmem:[%s202 + $0x30] sm:%s195]
                %217 = vst [vmem:[%s203 + $0x18] sm:%s195] %v216
                %v218 = vld [vmem:[%s202 + $0x38] sm:%s195]
                %219 = vst [vmem:[%s203 + $0x1c] sm:%s195] %v218
                %v220 = vld [vmem:[%s202 + $0x40] sm:%s195]
                %221 = vst [vmem:[%s203 + $0x20] sm:%s195] %v220
                %v222 = vld [vmem:[%s202 + $0x48] sm:%s195]
                %223 = vst [vmem:[%s203 + $0x24] sm:%s195] %v222
                %v224 = vld [vmem:[%s202 + $0x50] sm:%s195]
                %225 = vst [vmem:[%s203 + $0x28] sm:%s195] %v224
                %v226 = vld [vmem:[%s202 + $0x58] sm:%s195]
                %227 = vst [vmem:[%s203 + $0x2c] sm:%s195] %v226
                %v228 = vld [vmem:[%s202 + $0x60] sm:%s195]
                %229 = vst [vmem:[%s203 + $0x30] sm:%s195] %v228
                %v230 = vld [vmem:[%s202 + $0x68] sm:%s195]
                %231 = vst [vmem:[%s203 + $0x34] sm:%s195] %v230
                %v232 = vld [vmem:[%s202 + $0x70] sm:%s195]
                %233 = vst [vmem:[%s203 + $0x38] sm:%s195] %v232
                %v234 = vld [vmem:[%s202 + $0x78] sm:%s195]
                %235 = vst [vmem:[%s203 + $0x3c] sm:%s195] %v234
              $region37: #{tpu_custom_call.1} parent=31 // loop_footer
                %s201 = sadd.s32 1, %s197
              $region38: #{tpu_custom_call.1} parent=31 // loop_footer_branch
                %196 = sbr.rel target = $region34
              $region39: #{tpu_custom_call.1} parent=31 // loop_exit
                _
            $region32: #{tpu_custom_call.1} parent=23 // pred_fallthru
              _
          $region24: #{tpu_custom_call.1} parent=19 // pred_fallthru
            _
          %288 = vnop
        $region20: #{tpu_custom_call.1} parent=15 // pred_fallthru
          _
        // Predicated region
        $region58: #{tpu_custom_call.1} parent=15 // pred_check
          %p289 = pneg %p73
        $region59: #{tpu_custom_call.1} parent=15 // pred_check_branch
          %291 = sbr.rel (%p289) target = $region61
        $region60: #{tpu_custom_call.1} parent=15 // pred_region
          %s292 = smul.u32 16, %s21
          %p293 = scmp.lt.s32.totalorder %s292, 31
          %s294 = scalar_select %p293, %s292, 31
          %s295 = smul.addr %s294, 8
          %s296 = scalar_lea.vmem %s1, %s295
          %s297 = smul.u32 16, %s21
        $region61: #{tpu_custom_call.1} parent=15 // pred_fallthru
          _
        // Predicated region
        $region62: #{tpu_custom_call.1} parent=15 // pred_check
          %p298 = pneg %p99
        $region63: #{tpu_custom_call.1} parent=15 // pred_check_branch
          %300 = sbr.rel (%p298) target = $region65
        $region64: #{tpu_custom_call.1} parent=15 // pred_region
          %s301 = smul.u32 16, %s21
          %p302 = scmp.lt.s32.totalorder %s301, 31
          %s303 = scalar_select %p302, %s301, 31
          %s304 = smul.addr %s303, 8
          %s305 = scalar_lea.vmem %s2, %s304
          %s306 = smul.u32 16, %s21
        $region65: #{tpu_custom_call.1} parent=15 // pred_fallthru
          _
        // Predicated region
        $region66: #{tpu_custom_call.1} parent=15 // pred_check
          %p307 = pneg %p125
        $region67: #{tpu_custom_call.1} parent=15 // pred_check_branch
          %309 = sbr.rel (%p307) target = $region69
        $region68: #{tpu_custom_call.1} parent=15 // pred_region
          %s310 = smul.u32 16, %s20
          %p311 = scmp.lt.s32.totalorder %s310, 31
          %s312 = scalar_select %p311, %s310, 31
          %s313 = smul.addr %s312, 8
          %s314 = scalar_lea.vmem %s3, %s313
          %s315 = smul.u32 16, %s20
        $region69: #{tpu_custom_call.1} parent=15 // pred_fallthru
          _
      $region16: #{tpu_custom_call.1} parent=5 // pred_fallthru
        _
      %p316 = scmp.le.s32.totalorder 1, %s13
      %p317 = scmp.lt.s32.totalorder %s13, 5
      %p318 = pnand %p316, %p317
      %p319 = pneg %p318
      // Predicated region
      $region70: #{tpu_custom_call.1} parent=5 // pred_check
        _
      $region71: #{tpu_custom_call.1} parent=5 // pred_check_branch
        %321 = sbr.rel (%p318) target = $region73
      $region72: #{tpu_custom_call.1} parent=5 // pred_region
        %s322 = ssub.s32 %s13, 1
        %s323 = sand.u32 %s40, 1
        %s324 = sand.u32 %s40, 1
        %s325 = smul.addr %s324, 64
        %s326 = scalar_lea.vmem [#allocation3], %s325
        // Predicated region
        $region74: #{tpu_custom_call.1} parent=72 // pred_check
          %p327 = pneg %p53
        $region75: #{tpu_custom_call.1} parent=72 // pred_check_branch
          %329 = sbr.rel (%p327) target = $region77
        $region76: #{tpu_custom_call.1} parent=72 // pred_region
          _
        $region77: #{tpu_custom_call.1} parent=72 // pred_fallthru
          _
        %s330 = sand.u32 %s40, 1
        %s331 = sand.u32 %s40, 1
        %s332 = smul.addr %s331, 64
        %s333 = scalar_lea.vmem [#allocation3], %s332
        %p334 = pneg %p53
        %p335 = pneg %p50
        %s336 = smul.u32 16, %s23
        %p337 = scmp.lt.s32.totalorder %s336, 31
        %s338 = scalar_select %p337, %s336, 31
        %s339 = smul.addr %s338, 8
        %s340 = scalar_lea.vmem %s1, %s339
        %p341 = pneg %p79
        %p342 = pneg %p76
        %s343 = smul.u32 16, %s23
        %p344 = scmp.lt.s32.totalorder %s343, 31
        %s345 = scalar_select %p344, %s343, 31
        %s346 = smul.addr %s345, 8
        %s347 = scalar_lea.vmem %s2, %s346
        %p348 = pneg %p105
        %p349 = pneg %p102
        %s350 = smul.u32 16, %s22
        %p351 = scmp.lt.s32.totalorder %s350, 31
        %s352 = scalar_select %p351, %s350, 31
        %s353 = smul.addr %s352, 8
        %s354 = scalar_lea.vmem %s3, %s353
        %p355 = pneg %p131
        %p356 = pneg %p128
        %p357 = pneg %p157
        %p358 = pneg %p154
        %s359 = sand.u32 %s144, 1
        %s360 = scalar_lea.sflag [#allocation5], %s359
        %s361 = sand.u32 %s144, 1
        %s362 = smul.addr %s361, 128
        %s363 = scalar_lea.vmem [#allocation4], %s362
        %s364 = smul.u32 16, %s22
        %s365 = smul.u32 16, %s23
        %p366 = scmp.lt.s32.totalorder %s365, 31
        %s367 = scalar_select %p366, %s365, 31
        %s368 = smul.addr %s367, 8
        %s369 = scalar_lea.vmem %s1, %s368
        %s370 = smul.u32 16, %s23
        %s371 = smul.u32 16, %s23
        %p372 = scmp.lt.s32.totalorder %s371, 31
        %s373 = scalar_select %p372, %s371, 31
        %s374 = smul.addr %s373, 8
        %s375 = scalar_lea.vmem %s2, %s374
        %s376 = smul.u32 16, %s23
        %s377 = smul.u32 16, %s22
        %p378 = scmp.lt.s32.totalorder %s377, 31
        %s379 = scalar_select %p378, %s377, 31
        %s380 = smul.addr %s379, 8
        %s381 = scalar_lea.vmem %s3, %s380
        %s382 = smul.u32 16, %s22
        %s383 = smul.u32 16, %s22
        %p384 = scmp.eq.s32.totalorder %s23, 0
        // Predicated region
        $region78: #{tpu_custom_call.1} parent=72 // pred_check
          %p385 = pneg %p384
        $region79: #{tpu_custom_call.1} parent=72 // pred_check_branch
          %387 = sbr.rel (%p385) target = $region81
        $region80: #{tpu_custom_call.1} parent=72 // pred_region
          %388 = vst [vmem:[#allocation2] sm:$0xff] 0.0
          %389 = vst [vmem:[#allocation2 + $0x8] sm:$0xff] 0.0
          %390 = vst [vmem:[#allocation2 + $0x10] sm:$0xff] 0.0
          %391 = vst [vmem:[#allocation2 + $0x18] sm:$0xff] 0.0
          %392 = vst [vmem:[#allocation2 + $0x20] sm:$0xff] 0.0
          %393 = vst [vmem:[#allocation2 + $0x28] sm:$0xff] 0.0
          %394 = vst [vmem:[#allocation2 + $0x30] sm:$0xff] 0.0
          %395 = vst [vmem:[#allocation2 + $0x38] sm:$0xff] 0.0
          %396 = vst [vmem:[#allocation2 + $0x40] sm:$0xff] 0.0
          %397 = vst [vmem:[#allocation2 + $0x48] sm:$0xff] 0.0
          %398 = vst [vmem:[#allocation2 + $0x50] sm:$0xff] 0.0
          %399 = vst [vmem:[#allocation2 + $0x58] sm:$0xff] 0.0
          %400 = vst [vmem:[#allocation2 + $0x60] sm:$0xff] 0.0
          %401 = vst [vmem:[#allocation2 + $0x68] sm:$0xff] 0.0
          %402 = vst [vmem:[#allocation2 + $0x70] sm:$0xff] 0.0
          %403 = vst [vmem:[#allocation2 + $0x78] sm:$0xff] 0.0
        $region81: #{tpu_custom_call.1} parent=72 // pred_fallthru
          _
        %v404 = vld [vmem:[%s369] sm:$0xff]
        %v405 = vld [vmem:[%s369 + $0x8] sm:$0xff]
        %v406 = vld [vmem:[%s369 + $0x10] sm:$0xff]
        %v407 = vld [vmem:[%s369 + $0x18] sm:$0xff]
        %v408 = vld [vmem:[%s369 + $0x20] sm:$0xff]
        %v409 = vld [vmem:[%s369 + $0x28] sm:$0xff]
        %v410 = vld [vmem:[%s369 + $0x30] sm:$0xff]
        %v411 = vld [vmem:[%s369 + $0x38] sm:$0xff]
        %v412 = vld [vmem:[%s369 + $0x40] sm:$0xff]
        %v413 = vld [vmem:[%s369 + $0x48] sm:$0xff]
        %v414 = vld [vmem:[%s369 + $0x50] sm:$0xff]
        %v415 = vld [vmem:[%s369 + $0x58] sm:$0xff]
        %v416 = vld [vmem:[%s369 + $0x60] sm:$0xff]
        %v417 = vld [vmem:[%s369 + $0x68] sm:$0xff]
        %v418 = vld [vmem:[%s369 + $0x70] sm:$0xff]
        %v419 = vld [vmem:[%s369 + $0x78] sm:$0xff]
        %v420 = vld [vmem:[%s375] sm:$0xff]
        %v421 = vld [vmem:[%s375 + $0x8] sm:$0xff]
        %v422 = vld [vmem:[%s375 + $0x10] sm:$0xff]
        %v423 = vld [vmem:[%s375 + $0x18] sm:$0xff]
        %v424 = vld [vmem:[%s375 + $0x20] sm:$0xff]
        %v425 = vld [vmem:[%s375 + $0x28] sm:$0xff]
        %v426 = vld [vmem:[%s375 + $0x30] sm:$0xff]
        %v427 = vld [vmem:[%s375 + $0x38] sm:$0xff]
        %v428 = vld [vmem:[%s375 + $0x40] sm:$0xff]
        %v429 = vld [vmem:[%s375 + $0x48] sm:$0xff]
        %v430 = vld [vmem:[%s375 + $0x50] sm:$0xff]
        %v431 = vld [vmem:[%s375 + $0x58] sm:$0xff]
        %v432 = vld [vmem:[%s375 + $0x60] sm:$0xff]
        %v433 = vld [vmem:[%s375 + $0x68] sm:$0xff]
        %v434 = vld [vmem:[%s375 + $0x70] sm:$0xff]
        %v435 = vld [vmem:[%s375 + $0x78] sm:$0xff]
        %437 = vset.pattern.permute.xlu0 0
        %438 = vperm.xlu0 %437, %v420
        %v439 = vpop.permute.xlu0 %438
        %442 = vset.pattern.permute.xlu0 0
        %443 = vperm.xlu0 %442, %v421
        %v444 = vpop.permute.xlu0 %443
        %447 = vset.pattern.permute.xlu0 0
        %448 = vperm.xlu0 %447, %v422
        %v449 = vpop.permute.xlu0 %448
        %452 = vset.pattern.permute.xlu0 0
        %453 = vperm.xlu0 %452, %v423
        %v454 = vpop.permute.xlu0 %453
        %457 = vset.pattern.permute.xlu0 0
        %458 = vperm.xlu0 %457, %v424
        %v459 = vpop.permute.xlu0 %458
        %462 = vset.pattern.permute.xlu0 0
        %463 = vperm.xlu0 %462, %v425
        %v464 = vpop.permute.xlu0 %463
        %467 = vset.pattern.permute.xlu0 0
        %468 = vperm.xlu0 %467, %v426
        %v469 = vpop.permute.xlu0 %468
        %472 = vset.pattern.permute.xlu0 0
        %473 = vperm.xlu0 %472, %v427
        %v474 = vpop.permute.xlu0 %473
        %477 = vset.pattern.permute.xlu0 0
        %478 = vperm.xlu0 %477, %v428
        %v479 = vpop.permute.xlu0 %478
        %482 = vset.pattern.permute.xlu0 0
        %483 = vperm.xlu0 %482, %v429
        %v484 = vpop.permute.xlu0 %483
        %487 = vset.pattern.permute.xlu0 0
        %488 = vperm.xlu0 %487, %v430
        %v489 = vpop.permute.xlu0 %488
        %492 = vset.pattern.permute.xlu0 0
        %493 = vperm.xlu0 %492, %v431
        %v494 = vpop.permute.xlu0 %493
        %497 = vset.pattern.permute.xlu0 0
        %498 = vperm.xlu0 %497, %v432
        %v499 = vpop.permute.xlu0 %498
        %502 = vset.pattern.permute.xlu0 0
        %503 = vperm.xlu0 %502, %v433
        %v504 = vpop.permute.xlu0 %503
        %507 = vset.pattern.permute.xlu0 0
        %508 = vperm.xlu0 %507, %v434
        %v509 = vpop.permute.xlu0 %508
        %512 = vset.pattern.permute.xlu0 0
        %513 = vperm.xlu0 %512, %v435
        %v514 = vpop.permute.xlu0 %513
        %v516 = vmul.f32 %v404, %v439
        %v517 = vmul.f32 %v405, %v444
        %v518 = vmul.f32 %v406, %v449
        %v519 = vmul.f32 %v407, %v454
        %v520 = vmul.f32 %v408, %v459
        %v521 = vmul.f32 %v409, %v464
        %v522 = vmul.f32 %v410, %v469
        %v523 = vmul.f32 %v411, %v474
        %v524 = vmul.f32 %v412, %v479
        %v525 = vmul.f32 %v413, %v484
        %v526 = vmul.f32 %v414, %v489
        %v527 = vmul.f32 %v415, %v494
        %v528 = vmul.f32 %v416, %v499
        %v529 = vmul.f32 %v417, %v504
        %v530 = vmul.f32 %v418, %v509
        %v531 = vmul.f32 %v419, %v514
        %v532 = vld [vmem:[%s326] sm:$0xf]
        %v533 = vld [vmem:[%s326 + $0x4] sm:$0xf]
        %v534 = vld [vmem:[%s326 + $0x8] sm:$0xf]
        %v535 = vld [vmem:[%s326 + $0xc] sm:$0xf]
        %v536 = vld [vmem:[%s326 + $0x10] sm:$0xf]
        %v537 = vld [vmem:[%s326 + $0x14] sm:$0xf]
        %v538 = vld [vmem:[%s326 + $0x18] sm:$0xf]
        %v539 = vld [vmem:[%s326 + $0x1c] sm:$0xf]
        %v540 = vld [vmem:[%s326 + $0x20] sm:$0xf]
        %v541 = vld [vmem:[%s326 + $0x24] sm:$0xf]
        %v542 = vld [vmem:[%s326 + $0x28] sm:$0xf]
        %v543 = vld [vmem:[%s326 + $0x2c] sm:$0xf]
        %v544 = vld [vmem:[%s326 + $0x30] sm:$0xf]
        %v545 = vld [vmem:[%s326 + $0x34] sm:$0xf]
        %v546 = vld [vmem:[%s326 + $0x38] sm:$0xf]
        %v547 = vld [vmem:[%s326 + $0x3c] sm:$0xf]
        %v548 = vunpack.c.l.bf16 %v532
        %v549 = vunpack.c.l.bf16 %v533
        %v550 = vunpack.c.l.bf16 %v534
        %v551 = vunpack.c.l.bf16 %v535
        %v552 = vunpack.c.l.bf16 %v536
        %v553 = vunpack.c.l.bf16 %v537
        %v554 = vunpack.c.l.bf16 %v538
        %v555 = vunpack.c.l.bf16 %v539
        %v556 = vunpack.c.l.bf16 %v540
        %v557 = vunpack.c.l.bf16 %v541
        %v558 = vunpack.c.l.bf16 %v542
        %v559 = vunpack.c.l.bf16 %v543
        %v560 = vunpack.c.l.bf16 %v544
        %v561 = vunpack.c.l.bf16 %v545
        %v562 = vunpack.c.l.bf16 %v546
        %v563 = vunpack.c.l.bf16 %v547
        %v564 = vld [vmem:[#allocation2] sm:$0xff]
        %v565 = vld [vmem:[#allocation2 + $0x8] sm:$0xff]
        %v566 = vld [vmem:[#allocation2 + $0x10] sm:$0xff]
        %v567 = vld [vmem:[#allocation2 + $0x18] sm:$0xff]
        %v568 = vld [vmem:[#allocation2 + $0x20] sm:$0xff]
        %v569 = vld [vmem:[#allocation2 + $0x28] sm:$0xff]
        %v570 = vld [vmem:[#allocation2 + $0x30] sm:$0xff]
        %v571 = vld [vmem:[#allocation2 + $0x38] sm:$0xff]
        %v572 = vld [vmem:[#allocation2 + $0x40] sm:$0xff]
        %v573 = vld [vmem:[#allocation2 + $0x48] sm:$0xff]
        %v574 = vld [vmem:[#allocation2 + $0x50] sm:$0xff]
        %v575 = vld [vmem:[#allocation2 + $0x58] sm:$0xff]
        %v576 = vld [vmem:[#allocation2 + $0x60] sm:$0xff]
        %v577 = vld [vmem:[#allocation2 + $0x68] sm:$0xff]
        %v578 = vld [vmem:[#allocation2 + $0x70] sm:$0xff]
        %v579 = vld [vmem:[#allocation2 + $0x78] sm:$0xff]
        %580 = vmatprep.subr.mxu0 0.0
        %581 = vmatpush1.msra.mxu0 %v531
        %582 = vmatprep.subr.mxu0 0.0
        %583 = vmatpush1.msra.mxu0 %v530
        %584 = vmatprep.subr.mxu0 0.0
        %585 = vmatpush1.msra.mxu0 %v529
        %586 = vmatprep.subr.mxu0 0.0
        %587 = vmatpush1.msra.mxu0 %v528
        %588 = vmatprep.subr.mxu0 0.0
        %589 = vmatpush1.msra.mxu0 %v527
        %590 = vmatprep.subr.mxu0 0.0
        %591 = vmatpush1.msra.mxu0 %v526
        %592 = vmatprep.subr.mxu0 0.0
        %593 = vmatpush1.msra.mxu0 %v525
        %594 = vmatprep.subr.mxu0 0.0
        %595 = vmatpush1.msra.mxu0 %v524
        %596 = vmatprep.subr.mxu0 0.0
        %597 = vmatpush1.msra.mxu0 %v523
        %598 = vmatprep.subr.mxu0 0.0
        %599 = vmatpush1.msra.mxu0 %v522
        %600 = vmatprep.subr.mxu0 0.0
        %601 = vmatpush1.msra.mxu0 %v521
        %602 = vmatprep.subr.mxu0 0.0
        %603 = vmatpush1.msra.mxu0 %v520
        %604 = vmatprep.subr.mxu0 0.0
        %605 = vmatpush1.msra.mxu0 %v519
        %606 = vmatprep.subr.mxu0 0.0
        %607 = vmatpush1.msra.mxu0 %v518
        %608 = vmatprep.subr.mxu0 0.0
        %609 = vmatpush1.msra.mxu0 %v517
        %610 = vmatprep.subr.mxu0 0.0
        %611 = vmatpush1.msra.mxu0 %v516
        %612 = vmatprep.subr.mxu0 0.0
        %613 = vmatpush2.msra.mxu0 0.0
        %614 = vmatprep.subr.mxu0 0.0
        %615 = vmatpush2.msra.mxu0 0.0
        %616 = vmatprep.subr.mxu0 0.0
        %617 = vmatpush2.msra.mxu0 0.0
        %618 = vmatprep.subr.mxu0 0.0
        %619 = vmatpush2.msra.mxu0 0.0
        %620 = vmatprep.subr.mxu0 0.0
        %621 = vmatpush2.msra.mxu0 0.0
        %622 = vmatprep.subr.mxu0 0.0
        %623 = vmatpush2.msra.mxu0 0.0
        %624 = vmatprep.subr.mxu0 0.0
        %625 = vmatpush2.msra.mxu0 0.0
        %626 = vmatprep.subr.mxu0 0.0
        %627 = vmatpush2.msra.mxu0 0.0
        %628 = vmatprep.subr.mxu0 0.0
        %629 = vmatpush2.msra.mxu0 0.0
        %630 = vmatprep.subr.mxu0 0.0
        %631 = vmatpush2.msra.mxu0 0.0
        %632 = vmatprep.subr.mxu0 0.0
        %633 = vmatpush2.msra.mxu0 0.0
        %634 = vmatprep.subr.mxu0 0.0
        %635 = vmatpush2.msra.mxu0 0.0
        %636 = vmatprep.subr.mxu0 0.0
        %637 = vmatpush2.msra.mxu0 0.0
        %638 = vmatprep.subr.mxu0 0.0
        %639 = vmatpush2.msra.mxu0 0.0
        %640 = vmatprep.subr.mxu0 0.0
        %641 = vmatpush2.msra.mxu0 0.0
        %642 = vmatprep.subr.mxu0 0.0
        %643 = vmatpush2.msra.mxu0 0.0
        %644 = vmatprep.mubr.f32.mxu0 0.0
        %645 = vmatmul.mubr.f32.gmra.mxu0 %v548
        %v646 = vpop.f32.mrf.mxu0
        %v647 = vadd.f32 0.0, %v646
        %v648 = vpop.f32.mrf.mxu0
        %649 = vmatprep.mubr.f32.mxu0 0.0
        %650 = vmatmul.mubr.f32.gmra.mxu0 %v549
        %v651 = vpop.f32.mrf.mxu0
        %v652 = vadd.f32 0.0, %v651
        %v653 = vpop.f32.mrf.mxu0
        %654 = vmatprep.mubr.f32.mxu0 0.0
        %655 = vmatmul.mubr.f32.gmra.mxu0 %v550
        %v656 = vpop.f32.mrf.mxu0
        %v657 = vadd.f32 0.0, %v656
        %v658 = vpop.f32.mrf.mxu0
        %659 = vmatprep.mubr.f32.mxu0 0.0
        %660 = vmatmul.mubr.f32.gmra.mxu0 %v551
        %v661 = vpop.f32.mrf.mxu0
        %v662 = vadd.f32 0.0, %v661
        %v663 = vpop.f32.mrf.mxu0
        %664 = vmatprep.mubr.f32.mxu0 0.0
        %665 = vmatmul.mubr.f32.gmra.mxu0 %v552
        %v666 = vpop.f32.mrf.mxu0
        %v667 = vadd.f32 0.0, %v666
        %v668 = vpop.f32.mrf.mxu0
        %669 = vmatprep.mubr.f32.mxu0 0.0
        %670 = vmatmul.mubr.f32.gmra.mxu0 %v553
        %v671 = vpop.f32.mrf.mxu0
        %v672 = vadd.f32 0.0, %v671
        %v673 = vpop.f32.mrf.mxu0
        %674 = vmatprep.mubr.f32.mxu0 0.0
        %675 = vmatmul.mubr.f32.gmra.mxu0 %v554
        %v676 = vpop.f32.mrf.mxu0
        %v677 = vadd.f32 0.0, %v676
        %v678 = vpop.f32.mrf.mxu0
        %679 = vmatprep.mubr.f32.mxu0 0.0
        %680 = vmatmul.mubr.f32.gmra.mxu0 %v555
        %v681 = vpop.f32.mrf.mxu0
        %v682 = vadd.f32 0.0, %v681
        %v683 = vpop.f32.mrf.mxu0
        %684 = vmatprep.mubr.f32.mxu0 0.0
        %685 = vmatmul.mubr.f32.gmra.mxu0 %v556
        %v686 = vpop.f32.mrf.mxu0
        %v687 = vadd.f32 0.0, %v686
        %v688 = vpop.f32.mrf.mxu0
        %689 = vmatprep.mubr.f32.mxu0 0.0
        %690 = vmatmul.mubr.f32.gmra.mxu0 %v557
        %v691 = vpop.f32.mrf.mxu0
        %v692 = vadd.f32 0.0, %v691
        %v693 = vpop.f32.mrf.mxu0
        %694 = vmatprep.mubr.f32.mxu0 0.0
        %695 = vmatmul.mubr.f32.gmra.mxu0 %v558
        %v696 = vpop.f32.mrf.mxu0
        %v697 = vadd.f32 0.0, %v696
        %v698 = vpop.f32.mrf.mxu0
        %699 = vmatprep.mubr.f32.mxu0 0.0
        %700 = vmatmul.mubr.f32.gmra.mxu0 %v559
        %v701 = vpop.f32.mrf.mxu0
        %v702 = vadd.f32 0.0, %v701
        %v703 = vpop.f32.mrf.mxu0
        %704 = vmatprep.mubr.f32.mxu0 0.0
        %705 = vmatmul.mubr.f32.gmra.mxu0 %v560
        %v706 = vpop.f32.mrf.mxu0
        %v707 = vadd.f32 0.0, %v706
        %v708 = vpop.f32.mrf.mxu0
        %709 = vmatprep.mubr.f32.mxu0 0.0
        %710 = vmatmul.mubr.f32.gmra.mxu0 %v561
        %v711 = vpop.f32.mrf.mxu0
        %v712 = vadd.f32 0.0, %v711
        %v713 = vpop.f32.mrf.mxu0
        %714 = vmatprep.mubr.f32.mxu0 0.0
        %715 = vmatmul.mubr.f32.gmra.mxu0 %v562
        %v716 = vpop.f32.mrf.mxu0
        %v717 = vadd.f32 0.0, %v716
        %v718 = vpop.f32.mrf.mxu0
        %719 = vmatprep.mubr.f32.mxu0 0.0
        %720 = vmatmul.mubr.f32.gmra.mxu0 %v563
        %v721 = vpop.f32.mrf.mxu0
        %v722 = vadd.f32 0.0, %v721
        %v723 = vpop.f32.mrf.mxu0
        %724 = vdwg.mxu0
        %v725 = vadd.f32 %v564, %v647
        %v726 = vadd.f32 %v565, %v652
        %v727 = vadd.f32 %v566, %v657
        %v728 = vadd.f32 %v567, %v662
        %v729 = vadd.f32 %v568, %v667
        %v730 = vadd.f32 %v569, %v672
        %v731 = vadd.f32 %v570, %v677
        %v732 = vadd.f32 %v571, %v682
        %v733 = vadd.f32 %v572, %v687
        %v734 = vadd.f32 %v573, %v692
        %v735 = vadd.f32 %v574, %v697
        %v736 = vadd.f32 %v575, %v702
        %v737 = vadd.f32 %v576, %v707
        %v738 = vadd.f32 %v577, %v712
        %v739 = vadd.f32 %v578, %v717
        %v740 = vadd.f32 %v579, %v722
        %741 = vst [vmem:[#allocation2] sm:$0xff] %v725
        %742 = vst [vmem:[#allocation2 + $0x8] sm:$0xff] %v726
        %743 = vst [vmem:[#allocation2 + $0x10] sm:$0xff] %v727
        %744 = vst [vmem:[#allocation2 + $0x18] sm:$0xff] %v728
        %745 = vst [vmem:[#allocation2 + $0x20] sm:$0xff] %v729
        %746 = vst [vmem:[#allocation2 + $0x28] sm:$0xff] %v730
        %747 = vst [vmem:[#allocation2 + $0x30] sm:$0xff] %v731
        %748 = vst [vmem:[#allocation2 + $0x38] sm:$0xff] %v732
        %749 = vst [vmem:[#allocation2 + $0x40] sm:$0xff] %v733
        %750 = vst [vmem:[#allocation2 + $0x48] sm:$0xff] %v734
        %751 = vst [vmem:[#allocation2 + $0x50] sm:$0xff] %v735
        %752 = vst [vmem:[#allocation2 + $0x58] sm:$0xff] %v736
        %753 = vst [vmem:[#allocation2 + $0x60] sm:$0xff] %v737
        %754 = vst [vmem:[#allocation2 + $0x68] sm:$0xff] %v738
        %755 = vst [vmem:[#allocation2 + $0x70] sm:$0xff] %v739
        %756 = vst [vmem:[#allocation2 + $0x78] sm:$0xff] %v740
        %p757 = scmp.eq.s32.totalorder %s23, 1
        // Predicated region
        $region82: #{tpu_custom_call.1} parent=72 // pred_check
          %p758 = pneg %p757
        $region83: #{tpu_custom_call.1} parent=72 // pred_check_branch
          %760 = sbr.rel (%p758) target = $region85
        $region84: #{tpu_custom_call.1} parent=72 // pred_region
          %v761 = vld [vmem:[#allocation2] sm:$0xff]
          %v762 = vld [vmem:[#allocation2 + $0x8] sm:$0xff]
          %v763 = vld [vmem:[#allocation2 + $0x10] sm:$0xff]
          %v764 = vld [vmem:[#allocation2 + $0x18] sm:$0xff]
          %v765 = vld [vmem:[#allocation2 + $0x20] sm:$0xff]
          %v766 = vld [vmem:[#allocation2 + $0x28] sm:$0xff]
          %v767 = vld [vmem:[#allocation2 + $0x30] sm:$0xff]
          %v768 = vld [vmem:[#allocation2 + $0x38] sm:$0xff]
          %v769 = vld [vmem:[#allocation2 + $0x40] sm:$0xff]
          %v770 = vld [vmem:[#allocation2 + $0x48] sm:$0xff]
          %v771 = vld [vmem:[#allocation2 + $0x50] sm:$0xff]
          %v772 = vld [vmem:[#allocation2 + $0x58] sm:$0xff]
          %v773 = vld [vmem:[#allocation2 + $0x60] sm:$0xff]
          %v774 = vld [vmem:[#allocation2 + $0x68] sm:$0xff]
          %v775 = vld [vmem:[#allocation2 + $0x70] sm:$0xff]
          %v776 = vld [vmem:[#allocation2 + $0x78] sm:$0xff]
          %v777 = vld [vmem:[%s381] sm:$0xff]
          %v778 = vld [vmem:[%s381 + $0x8] sm:$0xff]
          %v779 = vld [vmem:[%s381 + $0x10] sm:$0xff]
          %v780 = vld [vmem:[%s381 + $0x18] sm:$0xff]
          %v781 = vld [vmem:[%s381 + $0x20] sm:$0xff]
          %v782 = vld [vmem:[%s381 + $0x28] sm:$0xff]
          %v783 = vld [vmem:[%s381 + $0x30] sm:$0xff]
          %v784 = vld [vmem:[%s381 + $0x38] sm:$0xff]
          %v785 = vld [vmem:[%s381 + $0x40] sm:$0xff]
          %v786 = vld [vmem:[%s381 + $0x48] sm:$0xff]
          %v787 = vld [vmem:[%s381 + $0x50] sm:$0xff]
          %v788 = vld [vmem:[%s381 + $0x58] sm:$0xff]
          %v789 = vld [vmem:[%s381 + $0x60] sm:$0xff]
          %v790 = vld [vmem:[%s381 + $0x68] sm:$0xff]
          %v791 = vld [vmem:[%s381 + $0x70] sm:$0xff]
          %v792 = vld [vmem:[%s381 + $0x78] sm:$0xff]
          %794 = vset.pattern.permute.xlu0 0
          %795 = vperm.xlu0 %794, %v777
          %v796 = vpop.permute.xlu0 %795
          %799 = vset.pattern.permute.xlu0 0
          %800 = vperm.xlu0 %799, %v778
          %v801 = vpop.permute.xlu0 %800
          %804 = vset.pattern.permute.xlu0 0
          %805 = vperm.xlu0 %804, %v779
          %v806 = vpop.permute.xlu0 %805
          %809 = vset.pattern.permute.xlu0 0
          %810 = vperm.xlu0 %809, %v780
          %v811 = vpop.permute.xlu0 %810
          %814 = vset.pattern.permute.xlu0 0
          %815 = vperm.xlu0 %814, %v781
          %v816 = vpop.permute.xlu0 %815
          %819 = vset.pattern.permute.xlu0 0
          %820 = vperm.xlu0 %819, %v782
          %v821 = vpop.permute.xlu0 %820
          %824 = vset.pattern.permute.xlu0 0
          %825 = vperm.xlu0 %824, %v783
          %v826 = vpop.permute.xlu0 %825
          %829 = vset.pattern.permute.xlu0 0
          %830 = vperm.xlu0 %829, %v784
          %v831 = vpop.permute.xlu0 %830
          %834 = vset.pattern.permute.xlu0 0
          %835 = vperm.xlu0 %834, %v785
          %v836 = vpop.permute.xlu0 %835
          %839 = vset.pattern.permute.xlu0 0
          %840 = vperm.xlu0 %839, %v786
          %v841 = vpop.permute.xlu0 %840
          %844 = vset.pattern.permute.xlu0 0
          %845 = vperm.xlu0 %844, %v787
          %v846 = vpop.permute.xlu0 %845
          %849 = vset.pattern.permute.xlu0 0
          %850 = vperm.xlu0 %849, %v788
          %v851 = vpop.permute.xlu0 %850
          %854 = vset.pattern.permute.xlu0 0
          %855 = vperm.xlu0 %854, %v789
          %v856 = vpop.permute.xlu0 %855
          %859 = vset.pattern.permute.xlu0 0
          %860 = vperm.xlu0 %859, %v790
          %v861 = vpop.permute.xlu0 %860
          %864 = vset.pattern.permute.xlu0 0
          %865 = vperm.xlu0 %864, %v791
          %v866 = vpop.permute.xlu0 %865
          %869 = vset.pattern.permute.xlu0 0
          %870 = vperm.xlu0 %869, %v792
          %v871 = vpop.permute.xlu0 %870
          %v873 = vmul.f32 %v761, %v796
          %v874 = vmul.f32 %v762, %v801
          %v875 = vmul.f32 %v763, %v806
          %v876 = vmul.f32 %v764, %v811
          %v877 = vmul.f32 %v765, %v816
          %v878 = vmul.f32 %v766, %v821
          %v879 = vmul.f32 %v767, %v826
          %v880 = vmul.f32 %v768, %v831
          %v881 = vmul.f32 %v769, %v836
          %v882 = vmul.f32 %v770, %v841
          %v883 = vmul.f32 %v771, %v846
          %v884 = vmul.f32 %v772, %v851
          %v885 = vmul.f32 %v773, %v856
          %v886 = vmul.f32 %v774, %v861
          %v887 = vmul.f32 %v775, %v866
          %v888 = vmul.f32 %v776, %v871
          %889 = vst [vmem:[%s363] sm:$0xff] %v873
          %890 = vst [vmem:[%s363 + $0x8] sm:$0xff] %v874
          %891 = vst [vmem:[%s363 + $0x10] sm:$0xff] %v875
          %892 = vst [vmem:[%s363 + $0x18] sm:$0xff] %v876
          %893 = vst [vmem:[%s363 + $0x20] sm:$0xff] %v877
          %894 = vst [vmem:[%s363 + $0x28] sm:$0xff] %v878
          %895 = vst [vmem:[%s363 + $0x30] sm:$0xff] %v879
          %896 = vst [vmem:[%s363 + $0x38] sm:$0xff] %v880
          %897 = vst [vmem:[%s363 + $0x40] sm:$0xff] %v881
          %898 = vst [vmem:[%s363 + $0x48] sm:$0xff] %v882
          %899 = vst [vmem:[%s363 + $0x50] sm:$0xff] %v883
          %900 = vst [vmem:[%s363 + $0x58] sm:$0xff] %v884
          %901 = vst [vmem:[%s363 + $0x60] sm:$0xff] %v885
          %902 = vst [vmem:[%s363 + $0x68] sm:$0xff] %v886
          %903 = vst [vmem:[%s363 + $0x70] sm:$0xff] %v887
          %904 = vst [vmem:[%s363 + $0x78] sm:$0xff] %v888
        $region85: #{tpu_custom_call.1} parent=72 // pred_fallthru
          _
        %s905 = sand.u32 %s144, 1
        %s906 = scalar_lea.sflag [#allocation5], %s905
        %s907 = sand.u32 %s144, 1
        %s908 = smul.addr %s907, 128
        %s909 = scalar_lea.vmem [#allocation4], %s908
        // Predicated region
        $region86: #{tpu_custom_call.1} parent=72 // pred_check
          %p910 = pneg %p154
        $region87: #{tpu_custom_call.1} parent=72 // pred_check_branch
          %912 = sbr.rel (%p910) target = $region89
        $region88: #{tpu_custom_call.1} parent=72 // pred_region
          %s913 = smul.u32 16, %s22
          %s915 = ssub.s32 2048, 2048
          %916 = vsyncadd %s906, %s915
          %s917 = smul.addr %s913, 128
          %s918 = scalar_lea.hbm %s4, %s917
          %s919 = sshll.u32 %s909, 4
          %s920 = int_to_ptr.vmem [resolvable:$true] %s919
          %925 = dma.vmem_to_hbm [thread:$0]  %s920, 2048, %s918, %s906, 128, 128, 8
        $region89: #{tpu_custom_call.1} parent=72 // pred_fallthru
          _
      $region73: #{tpu_custom_call.1} parent=5 // pred_fallthru
        _
      %p926 = scmp.le.s32.totalorder 2, %s13
      // Predicated region
      $region90: #{tpu_custom_call.1} parent=5 // pred_check
        %p927 = pneg %p926
      $region91: #{tpu_custom_call.1} parent=5 // pred_check_branch
        %929 = sbr.rel (%p927) target = $region93
      $region92: #{tpu_custom_call.1} parent=5 // pred_region
        %s930 = ssub.s32 %s13, 2
        // Predicated region
        $region94: #{tpu_custom_call.1} parent=92 // pred_check
          %p931 = pneg %p160
        $region95: #{tpu_custom_call.1} parent=92 // pred_check_branch
          %933 = sbr.rel (%p931) target = $region97
        $region96: #{tpu_custom_call.1} parent=92 // pred_region
          %s934 = sand.u32 %s145, 1
          %s935 = scalar_lea.sflag [#allocation5], %s934
          %s936 = sand.u32 %s145, 1
          %s937 = smul.addr %s936, 128
          %s938 = scalar_lea.vmem [#allocation4], %s937
          %939 = dma.done %s935, 2048
        $region97: #{tpu_custom_call.1} parent=92 // pred_fallthru
          _
      $region93: #{tpu_custom_call.1} parent=5 // pred_fallthru
        _
    $region6: #{tpu_custom_call.1} parent=1 // loop_footer
      %s17 = sadd.s32 1, %s13
    $region7: #{tpu_custom_call.1} parent=1 // loop_footer_branch
      %12 = sbr.rel target = $region3
    $region8: #{tpu_custom_call.1} parent=1 // loop_exit
      _
    %940 = vsyncpa [#allocation5], 1
    %s941 = scalar_lea.sflag [#allocation5], 1
    %942 = vsyncpa %s941, 1

</llo_original>
